<compile_context>
chip_gen: v7x
topology: tpu7x:2x2x1
jax: 0.10.0
libtpu: 0.0.40
codegen_flags: <defaults>
</compile_context>

<pallas_src>
import functools
import math
import random

import jax
import jax.numpy as jnp
from jax import lax
from jax.experimental import pallas as pl
from jax.experimental.pallas import tpu as pltpu


# ---------------------------------------------------------------------------
# Pallas kernels
# ---------------------------------------------------------------------------
def _gather_warp_kernel(idx_ref, x_ref, o_ref):
    """Direct gather: o[p, i] = x[p, idx[i]] for one 8-plane group."""
    idx = jnp.broadcast_to(idx_ref[...], x_ref.shape)            # (8, HWp) i32
    o_ref[...] = jnp.take_along_axis(x_ref[...], idx, axis=1,
                                     mode="promise_in_bounds")


def _matmul_warp_kernel(idx_ref, x_ref, o_ref, *, chunk):
    """Fallback gather via K-chunked one-hot selection contracted on the MXU.

    Chunking the contraction (K = HWp) bounds the selection slab to
    (chunk, T) so VMEM scratch stays small even for large images.
    """
    p, hwp = x_ref.shape
    t = o_ref.shape[1]
    src = idx_ref[...]                                           # (1, T) i32
    acc = jnp.zeros((p, t), jnp.float32)
    for k0 in range(0, hwp, chunk):                              # static unroll
        rows = lax.broadcasted_iota(jnp.int32, (chunk, t), 0) + k0
        sel = (rows == src).astype(x_ref.dtype)                  # (chunk, T)
        acc = acc + jnp.dot(x_ref[:, k0:k0 + chunk], sel,
                            preferred_element_type=jnp.float32)
    o_ref[...] = acc.astype(o_ref.dtype)


# ---------------------------------------------------------------------------
# pallas_call wrappers
# ---------------------------------------------------------------------------
def _gather_warp_call(x_pad, idx_row):
    p_pad, hwp = x_pad.shape
    itemsize = x_pad.dtype.itemsize
    return pl.pallas_call(
        _gather_warp_kernel,
        out_shape=jax.ShapeDtypeStruct((p_pad, hwp), x_pad.dtype),
        grid=(p_pad // 8,),                         # one 8-plane group per step
        in_specs=[
            pl.BlockSpec((1, hwp), lambda g: (0, 0)),     # composed indices
            pl.BlockSpec((8, hwp), lambda g: (g, 0)),     # 8 planes per step
        ],
        out_specs=pl.BlockSpec((8, hwp), lambda g: (g, 0)),
        compiler_params=pltpu.CompilerParams(
            dimension_semantics=("parallel",)),
        cost_estimate=pl.CostEstimate(
            flops=p_pad * hwp,
            transcendentals=0,
            bytes_accessed=2 * p_pad * hwp * itemsize + 4 * hwp),
    )(idx_row, x_pad)


def _pick_lane_tile(hwp):
    """Largest lane-dense tile (multiple of 128) dividing hwp, >=2 steps when possible."""
    t = max(min((hwp // 2 // 128) * 128, 2048), 128)
    while hwp % t != 0:
        t -= 128
    return t


def _pick_k_chunk(hwp):
    """Largest multiple-of-128 divisor of hwp that is <= 512 (bounds sel scratch)."""
    c = (min(hwp, 512) // 128) * 128
    while hwp % c != 0:
        c -= 128
    return c


def _matmul_warp_call(x_pad, idx_row):
    p_pad, hwp = x_pad.shape
    t = _pick_lane_tile(hwp)
    chunk = _pick_k_chunk(hwp)
    itemsize = x_pad.dtype.itemsize
    return pl.pallas_call(
        functools.partial(_matmul_warp_kernel, chunk=chunk),
        out_shape=jax.ShapeDtypeStruct((p_pad, hwp), x_pad.dtype),
        grid=(hwp // t,),
        in_specs=[
            pl.BlockSpec((1, t), lambda j: (0, j)),          # composed indices
            pl.BlockSpec((p_pad, hwp), lambda j: (0, 0)),    # resident planes
        ],
        out_specs=pl.BlockSpec((p_pad, t), lambda j: (0, j)),
        compiler_params=pltpu.CompilerParams(
            dimension_semantics=("parallel",),
            vmem_limit_bytes=32 * 1024 * 1024),
        cost_estimate=pl.CostEstimate(
            flops=2 * p_pad * hwp * hwp,
            transcendentals=0,
            bytes_accessed=2 * p_pad * hwp * itemsize + 4 * hwp),
    )(idx_row, x_pad)


# Per-(shape, dtype) cache of whether the direct-gather kernel lowers on this
# jaxlib / chip generation.  Probed once; afterwards no extra syncs.
_GATHER_LOWERS = {}


def _warp_composed(x_pad, idx_row):
    key = (x_pad.shape, str(x_pad.dtype))
    ok = _GATHER_LOWERS.get(key)
    if ok is None:
        try:
            out = jax.block_until_ready(_gather_warp_call(x_pad, idx_row))
            ref = jnp.take_along_axis(
                x_pad, jnp.broadcast_to(idx_row, x_pad.shape), axis=1)
            if not bool(jnp.all(out == ref)):
                raise ValueError("gather kernel mismatch")
            _GATHER_LOWERS[key] = True
            return out
        except Exception:
            _GATHER_LOWERS[key] = False
    if _GATHER_LOWERS[key]:
        return _gather_warp_call(x_pad, idx_row)
    return _matmul_warp_call(x_pad, idx_row)


# ---------------------------------------------------------------------------
# Host-side index-map construction & composition (cheap O(HW) jnp ops,
# no device->host syncs).
# ---------------------------------------------------------------------------
def _source_index_map(matrix, height, width):
    """Flat NEAREST source index + validity for an inverse-affine matrix
    (torchvision grid_sample convention, align_corners=False)."""
    m00, m01, m02, m10, m11, m12 = [float(v) for v in matrix]
    ys = jnp.arange(height, dtype=jnp.float32)
    xs = jnp.arange(width, dtype=jnp.float32)
    yy, xx = jnp.meshgrid(ys, xs, indexing="ij")
    xc = xx + 0.5 - 0.5 * width
    yc = yy + 0.5 - 0.5 * height
    sx = m00 * xc + m01 * yc + m02 + 0.5 * width - 0.5
    sy = m10 * xc + m11 * yc + m12 + 0.5 * height - 0.5
    sxi = jnp.round(sx).astype(jnp.int32)   # round-half-even, like grid_sample
    syi = jnp.round(sy).astype(jnp.int32)
    valid = (sxi >= 0) & (sxi < width) & (syi >= 0) & (syi < height)
    flat = jnp.clip(syi, 0, height - 1) * width + jnp.clip(sxi, 0, width - 1)
    return flat.reshape(-1).astype(jnp.int32), valid.reshape(-1)


def _compose_index_maps(matrices, height, width):
    """Compose per-op NEAREST index maps (exact for constant fill):
       out[i] = valid[i] ? img0[idx[i]] : fill."""
    hw = height * width
    idx = jnp.arange(hw, dtype=jnp.int32)
    valid = jnp.ones((hw,), dtype=jnp.bool_)
    for m in matrices:
        flat, v = _source_index_map(m, height, width)
        idx = jnp.take(idx, flat)
        valid = v & jnp.take(valid, flat)
    return idx, valid


def _warp_nearest_composed(img, idx, valid, fill):
    """Apply one composed NEAREST index map (constant fill) via a single Pallas call."""
    n, c, h, w = img.shape
    p, hw = n * c, h * w
    p_pad = ((p + 7) // 8) * 8                    # dense sublanes
    hwp = ((hw + 1 + 127) // 128) * 128           # dense lanes + fill column
    fill_col = hw                                 # invalid pixels read this column
    idx_full = jnp.full((hwp,), fill_col, jnp.int32)
    idx_full = idx_full.at[:hw].set(jnp.where(valid, idx, fill_col))
    idx_row = idx_full.reshape(1, hwp)
    x_pad = jnp.full((p_pad, hwp), fill, img.dtype)
    x_pad = x_pad.at[:p, :hw].set(img.reshape(p, hw))
    out = _warp_composed(x_pad, idx_row)
    return out[:p, :hw].reshape(n, c, h, w)


# ---------------------------------------------------------------------------
# RandAugment op metadata / inverse matrices (pure Python, mirrors torchvision).
# ---------------------------------------------------------------------------
def _linspace(lo, hi, n):
    return [lo + (hi - lo) * i / (n - 1) for i in range(n)]


def _augmentation_space(num_bins, image_size):
    height, width = image_size
    return {
        "Identity": ([0.0], False),
        "ShearX": (_linspace(0.0, 0.3, num_bins), True),
        "ShearY": (_linspace(0.0, 0.3, num_bins), True),
        "TranslateX": (_linspace(0.0, 150.0 / 331.0 * width, num_bins), True),
        "TranslateY": (_linspace(0.0, 150.0 / 331.0 * height, num_bins), True),
        "Rotate": (_linspace(0.0, 30.0, num_bins), True),
    }


def _get_inverse_affine_matrix(center, angle_deg, translate, scale, shear_deg):
    rot = math.radians(angle_deg)
    sx = math.radians(shear_deg[0])
    sy = math.radians(shear_deg[1])
    cx, cy = center
    tx, ty = translate
    a = math.cos(rot - sy) / math.cos(sy)
    b = -math.cos(rot - sy) * math.tan(sx) / math.cos(sy) - math.sin(rot)
    c = math.sin(rot - sy) / math.cos(sy)
    d = -math.sin(rot - sy) * math.tan(sx) / math.cos(sy) + math.cos(rot)
    m = [d, -b, 0.0, -c, a, 0.0]
    m = [v / scale for v in m]
    m[2] += m[0] * (-cx - tx) + m[1] * (-cy - ty)
    m[5] += m[3] * (-cx - tx) + m[4] * (-cy - ty)
    m[2] += cx
    m[5] += cy
    return m


def _op_to_matrix(op_name, magnitude, height, width):
    """Inverse affine matrix (centered coords) for one RandAugment op."""
    if op_name == "Identity":
        return None
    if op_name == "ShearX":
        center_f = [-0.5 * width, -0.5 * height]     # center=[0,0] in torchvision
        return _get_inverse_affine_matrix(
            center_f, 0.0, [0.0, 0.0], 1.0,
            [math.degrees(math.atan(magnitude)), 0.0])
    if op_name == "ShearY":
        center_f = [-0.5 * width, -0.5 * height]
        return _get_inverse_affine_matrix(
            center_f, 0.0, [0.0, 0.0], 1.0,
            [0.0, math.degrees(math.atan(magnitude))])
    if op_name == "TranslateX":
        return _get_inverse_affine_matrix(
            [0.0, 0.0], 0.0, [float(int(magnitude)), 0.0], 1.0, [0.0, 0.0])
    if op_name == "TranslateY":
        return _get_inverse_affine_matrix(
            [0.0, 0.0], 0.0, [0.0, float(int(magnitude))], 1.0, [0.0, 0.0])
    if op_name == "Rotate":
        return _get_inverse_affine_matrix(
            [0.0, 0.0], -magnitude, [0.0, 0.0], 1.0, [0.0, 0.0])
    raise ValueError(f"unknown op {op_name}")


class RandAugment:
    """JAX/Pallas port of the PyTorch RandAugment module (NEAREST, scalar fill).

    Op / magnitude / sign sampling uses a host-side Python RNG (no device<->host
    syncs); all sampled ops are fused into a single composed warp launch.
    """

    def __init__(self, num_ops=2, magnitude=9, num_magnitude_bins=31,
                 fill=2.0, seed=0):
        self.num_ops = num_ops
        self.magnitude = magnitude
        self.num_magnitude_bins = num_magnitude_bins
        self.fill = float(fill)
        self._rng = random.Random(seed)

    def _sample_matrices(self, height, width):
        op_meta = _augmentation_space(self.num_magnitude_bins, (height, width))
        names = list(op_meta.keys())
        matrices = []
        for _ in range(self.num_ops):
            op_name = names[self._rng.randrange(len(names))]
            magnitudes, signed = op_meta[op_name]
            magnitude = (float(magnitudes[self.magnitude])
                         if len(magnitudes) > 1 else 0.0)
            if signed and self._rng.randrange(2):
                magnitude = -magnitude
            m = _op_to_matrix(op_name, magnitude, height, width)
            if m is not None:
                matrices.append(m)
        return matrices

    def __call__(self, img):
        _, _, h, w = img.shape
        matrices = self._sample_matrices(h, w)
        if not matrices:                 # all Identity: no kernel launch
            return img
        idx, valid = _compose_index_maps(matrices, h, w)
        return _warp_nearest_composed(img, idx, valid, self.fill)


# ---------------------------------------------------------------------------
# Pure-JAX sequential reference (ordinary XLA gathers) for verification.
# ---------------------------------------------------------------------------
def _warp_reference_sequential(img, matrices, fill):
    n, c, h, w = img.shape
    out = img
    for m in matrices:
        flat, valid = _source_index_map(m, h, w)
        g = jnp.take(out.reshape(n * c, h * w), flat, axis=1)
        g = jnp.where(valid[None, :], g, jnp.asarray(fill, img.dtype))
        out = g.reshape(n, c, h, w)
    return out.astype(img.dtype)


if __name__ == "__main__":
    key = jax.random.PRNGKey(0)
    x = jax.random.uniform(key, (2, 4, 16, 16), dtype=jnp.float32)
    fill = 2.0

    # 1) Composed multi-op warp (single Pallas launch) vs sequential reference.
    test_cases = [
        [("Rotate", 9.0)],
        [("ShearX", 0.09), ("TranslateY", 2.0)],
        [("Rotate", -15.0), ("ShearY", -0.12), ("TranslateX", 3.0)],
    ]
    for ops in test_cases:
        mats = [_op_to_matrix(name, mag, 16, 16) for name, mag in ops]
        idx, valid = _compose_index_maps(mats, 16, 16)
        y = jax.block_until_ready(_warp_nearest_composed(x, idx, valid, fill))
        y_ref = _warp_reference_sequential(x, mats, fill)
        assert y.shape == x.shape and y.dtype == x.dtype
        assert bool(jnp.all(y == y_ref)), f"mismatch for {ops}"

    # 2) Full RandAugment forward pass (num_ops=2, magnitude=9, fill=2).
    aug = RandAugment(num_ops=2, magnitude=9, num_magnitude_bins=31,
                      fill=fill, seed=0)
    out = jax.block_until_ready(aug(x))
    assert out.shape == x.shape and out.dtype == x.dtype

    print("KERNEL_OK")
</pallas_src>

<mosaic_0001>
module attributes {stable_mosaic.version = 11 : i64} {
  func.func @_gather_warp_kernel(%arg0: i32, %arg1: memref<1x384xi32, #tpu.memory_space<vmem>>, %arg2: memref<8x384xf32, #tpu.memory_space<vmem>>, %arg3: memref<8x384xf32, #tpu.memory_space<vmem>>) attributes {dimension_semantics = [#tpu.dimension_semantics<parallel>], iteration_bounds = array<i64: 1>, scalar_prefetch = 0 : i64, scratch_operands = 0 : i64, tpu.core_type = #tpu.core_type<tc>, window_params = [{pipeline_mode = #tpu.pipeline_mode<synchronous>, transform_indices = @transform_0, window_bounds = array<i64: 1, 384>}, {transform_indices = @transform_1, window_bounds = array<i64: 8, 384>}, {transform_indices = @transform_2, window_bounds = array<i64: 8, 384>}]} {
    %c0 = arith.constant 0 : index
    %c0_0 = arith.constant 0 : index
    %0 = vector.load %arg1[%c0, %c0_0] : memref<1x384xi32, #tpu.memory_space<vmem>>, vector<1x384xi32>
    %1 = vector.shape_cast %0 : vector<1x384xi32> to vector<1x384xi32>
    %2 = vector.broadcast %1 : vector<1x384xi32> to vector<8x384xi32>
    %c0_1 = arith.constant 0 : index
    %c0_2 = arith.constant 0 : index
    %3 = vector.load %arg2[%c0_1, %c0_2] : memref<8x384xf32, #tpu.memory_space<vmem>>, vector<8x384xf32>
    %4 = vector.shape_cast %2 : vector<8x384xi32> to vector<8x384x1xi32>
    %5 = vector.shape_cast %4 : vector<8x384x1xi32> to vector<8x384xi32>
    %6 = tpu.dynamic_gather %3[%5] in [1] : vector<8x384xf32>, vector<8x384xi32> -> vector<8x384xf32>
    %c0_3 = arith.constant 0 : index
    %c0_4 = arith.constant 0 : index
    %7 = vector.load %arg3[%c0_3, %c0_4] : memref<8x384xf32, #tpu.memory_space<vmem>>, vector<8x384xf32>
    tpu.vector_store %arg3[%c0_3, %c0_4], %6 {strides = array<i32>} : memref<8x384xf32, #tpu.memory_space<vmem>>, vector<8x384xf32>,
    return
  }
  func.func @transform_0(%arg0: i32) -> (i32, i32) {
    %c0_i32 = arith.constant 0 : i32
    %c0_i32_0 = arith.constant 0 : i32
    %c0_i32_1 = arith.constant 0 : i32
    return %c0_i32, %c0_i32_0 : i32, i32
  }
  func.func @transform_1(%arg0: i32) -> (i32, i32) {
    %c0_i32 = arith.constant 0 : i32
    %c0_i32_0 = arith.constant 0 : i32
    return %arg0, %c0_i32 : i32, i32
  }
  func.func @transform_2(%arg0: i32) -> (i32, i32) {
    %c0_i32 = arith.constant 0 : i32
    %c0_i32_0 = arith.constant 0 : i32
    return %arg0, %c0_i32 : i32, i32
  }
}

module attributes {stable_mosaic.version = 11 : i64} {
  func.func @_matmul_warp_kernel(%arg0: i32, %arg1: memref<1x128xi32, #tpu.memory_space<vmem>>, %arg2: memref<8x384xf32, #tpu.memory_space<vmem>>, %arg3: memref<8x128xf32, #tpu.memory_space<vmem>>) attributes {dimension_semantics = [#tpu.dimension_semantics<parallel>], iteration_bounds = array<i64: 3>, scalar_prefetch = 0 : i64, scratch_operands = 0 : i64, tpu.core_type = #tpu.core_type<tc>, window_params = [{transform_indices = @transform_0, window_bounds = array<i64: 1, 128>}, {pipeline_mode = #tpu.pipeline_mode<synchronous>, transform_indices = @transform_1, window_bounds = array<i64: 8, 384>}, {transform_indices = @transform_2, window_bounds = array<i64: 8, 128>}]} {
    %c0 = arith.constant 0 : index
    %c0_0 = arith.constant 0 : index
    %0 = vector.load %arg1[%c0, %c0_0] : memref<1x128xi32, #tpu.memory_space<vmem>>, vector<1x128xi32>
    %cst = arith.constant 0.000000e+00 : f32
    %1 = vector.broadcast %cst : f32 to vector<8x128xf32>
    %2 = tpu.iota {dimensions = array<i32: 0>} : vector<384x128xi32>
    %c0_i32 = arith.constant 0 : i32
    %3 = vector.broadcast %c0_i32 : i32 to vector<384x128xi32>
    %4 = arith.addi %2, %3 : vector<384x128xi32>
    %5 = vector.broadcast %0 : vector<1x128xi32> to vector<384x128xi32>
    %6 = arith.cmpi eq, %4, %5 : vector<384x128xi32>
    %7 = arith.extui %6 : vector<384x128xi1> to vector<384x128xi32>
    %8 = arith.sitofp %7 : vector<384x128xi32> to vector<384x128xf32>
    %c0_1 = arith.constant 0 : index
    %c0_2 = arith.constant 0 : index
    %9 = vector.load %arg2[%c0_1, %c0_2] : memref<8x384xf32, #tpu.memory_space<vmem>>, vector<8x384xf32>
    %cst_3 = arith.constant dense<0.000000e+00> : vector<8x128xf32>
    %10 = tpu.matmul %9, %8, %cst_3 {dimension_numbers = #tpu.dot_dimension_numbers<[1], [0], [0], [1], [0, 0, 1, 1], [], []>} : vector<8x384xf32>, vector<384x128xf32>, vector<8x128xf32> -> vector<8x128xf32>
    %11 = arith.addf %1, %10 : vector<8x128xf32>
    %c0_4 = arith.constant 0 : index
    %c0_5 = arith.constant 0 : index
    %12 = vector.load %arg3[%c0_4, %c0_5] : memref<8x128xf32, #tpu.memory_space<vmem>>, vector<8x128xf32>
    tpu.vector_store %arg3[%c0_4, %c0_5], %11 {strides = array<i32>} : memref<8x128xf32, #tpu.memory_space<vmem>>, vector<8x128xf32>,
    return
  }
  func.func @transform_0(%arg0: i32) -> (i32, i32) {
    %c0_i32 = arith.constant 0 : i32
    %c0_i32_0 = arith.constant 0 : i32
    return %c0_i32, %arg0 : i32, i32
  }
  func.func @transform_1(%arg0: i32) -> (i32, i32) {
    %c0_i32 = arith.constant 0 : i32
    %c0_i32_0 = arith.constant 0 : i32
    %c0_i32_1 = arith.constant 0 : i32
    return %c0_i32, %c0_i32_0 : i32, i32
  }
  func.func @transform_2(%arg0: i32) -> (i32, i32) {
    %c0_i32 = arith.constant 0 : i32
    %c0_i32_0 = arith.constant 0 : i32
    return %c0_i32, %arg0 : i32, i32
  }
}

</mosaic_0001>

<llo_original>
// kernel: tpu_custom_call.1
$region0: #{tpu_custom_call.1}
  #allocation0 [shape = 'u32[]', space=smem, size = 0x4, offset = 0x4, fixed_abs, tag = 'smem constant byte address 0x4 - core index']
  #allocation1 [shape = 'u32[144,128]{1,0:T(1,128)}', space=vmem, size = 0x12000, scoped, tag = 'internal scratch']
  %s0 = inlined_call_operand.hbm [shape: s32[1,384], index: 0, kind: input, shape index: {}]
  %s1 = inlined_call_operand.hbm [shape: f32[8,384], index: 1, kind: input, shape index: {}]
  %s2 = inlined_call_operand.hbm [shape: f32[8,384], index: 2, kind: output, shape index: {}]
  %s3 = sld [smem:[#allocation0]]
  $region49: #{tpu_custom_call.1} parent=0
    _
  %s5 = ssub.s32 1, %s3
  %s6 = scalar_select 0, %s5, %s3
  $region1: #{tpu_custom_call.1} parent=0
    #allocation2 [shape = 'u8[1024]{0}', space=vmem, size = 0x400, scoped, tag = 'input window, operand 0']
    #allocation3 [shape = 's32[2]{0}', space=sflag, size = 0x8, scoped, tag = 'scoped memory for tpu_custom_call.1']
    #allocation4 [shape = 's32[2]{0}', space=sflag, size = 0x8, scoped, tag = 'scoped memory for tpu_custom_call.1']
    #allocation5 [shape = 'u8[12288]{0}', space=vmem, size = 0x3000, scoped, tag = 'input window, operand 1, single buffered']
    #allocation6 [shape = 's32[1]{0}', space=sflag, size = 0x4, scoped, tag = 'scoped memory for tpu_custom_call.1']
    #allocation7 [shape = 'u8[8192]{0}', space=vmem, size = 0x2000, scoped, tag = 'output window, operand 0']
    %7 = vsyncpa [#allocation3], 0
    %s8 = scalar_lea.sflag [#allocation3], 1
    %9 = vsyncpa %s8, 0
    %10 = vsyncpa [#allocation6], 0
    %11 = vsyncpa [#allocation4], 0
    %s12 = scalar_lea.sflag [#allocation4], 1
    %13 = vsyncpa %s12, 0
    loop: start=0, step=1, limit=5
    $region2: #{tpu_custom_call.1} parent=1 // loop_pre_header
      _
    $region3: #{tpu_custom_call.1} parent=1 // loop_header
      %s15 = sphi 0, %s19
      %p16 = scmp.ge.s32.totalorder %s15, 5
      %s25 = sphi 0, %s27
      %s28 = sphi 0, %s25
      %s29 = sphi 0, %s28
      %s45 = sphi 0, %s29
      %s49 = sphi 0, %s49
      %s51 = sphi 0, %s49
      %s52 = sphi 0, %s51
      %s66 = sphi 0, %s52
      %s72 = sphi 0, %s74
      %s75 = sphi 0, %s72
      %s76 = sphi 0, %s75
      %s92 = sphi 0, %s76
    $region4: #{tpu_custom_call.1} parent=1 // loop_header_branch
      %18 = sbr.rel (%p16) target = $region8
    $region5: #{tpu_custom_call.1} parent=1 // loop_body
      %s20 = ssub.s32 %s15, 1
      %s21 = ssub.s32 %s15, 2
      %s22 = sadd.s32 %s15, 1
      %s23 = ssub.s32 %s15, %s22
      %p24 = scmp.eq.s32.totalorder %s23, 0
      %s26 = sadd.s32 %s25, 1
      %s27 = scalar_select %p24, %s25, %s26
      %p30 = pneg %p24
      %p31 = scmp.eq.s32.totalorder %s15, 2
      %p32 = por %p30, %p31
      %p33 = scmp.ne.s32.totalorder %s25, %s28
      %p34 = scmp.eq.s32.totalorder %s15, 0
      %p35 = por %p33, %p34
      %p36 = scmp.ne.s32.totalorder %s25, %s28
      %p37 = scmp.eq.s32.totalorder %s20, 2
      %p38 = por %p36, %p37
      %p39 = scmp.ne.s32.totalorder %s28, %s29
      %p40 = scmp.eq.s32.totalorder %s20, 0
      %p41 = por %p39, %p40
      %p42 = scmp.ne.s32.totalorder %s28, %s29
      %p43 = scmp.eq.s32.totalorder %s21, 2
      %p44 = por %p42, %p43
      %p46 = scmp.ne.s32.totalorder %s29, %s45
      %p47 = scmp.eq.s32.totalorder %s21, 0
      %p48 = por %p46, %p47
      %s50 = sadd.s32 %s49, 1
      %p53 = scmp.eq.s32.totalorder %s15, 2
      %p54 = scmp.ne.s32.totalorder %s49, %s51
      %p55 = scmp.eq.s32.totalorder %s15, 0
      %p56 = por %p54, %p55
      %p57 = scmp.ne.s32.totalorder %s49, %s51
      %p58 = scmp.eq.s32.totalorder %s20, 2
      %p59 = por %p57, %p58
      %p60 = scmp.ne.s32.totalorder %s51, %s52
      %p61 = scmp.eq.s32.totalorder %s20, 0
      %p62 = por %p60, %p61
      %p63 = scmp.ne.s32.totalorder %s51, %s52
      %p64 = scmp.eq.s32.totalorder %s21, 2
      %p65 = por %p63, %p64
      %p67 = scmp.ne.s32.totalorder %s52, %s66
      %p68 = scmp.eq.s32.totalorder %s21, 0
      %p69 = por %p67, %p68
      %s70 = ssub.s32 %s15, %s22
      %p71 = scmp.eq.s32.totalorder %s70, 0
      %s73 = sadd.s32 %s72, 1
      %s74 = scalar_select %p71, %s72, %s73
      %p77 = pneg %p71
      %p78 = scmp.eq.s32.totalorder %s15, 2
      %p79 = por %p77, %p78
      %p80 = scmp.ne.s32.totalorder %s72, %s75
      %p81 = scmp.eq.s32.totalorder %s15, 0
      %p82 = por %p80, %p81
      %p83 = scmp.ne.s32.totalorder %s72, %s75
      %p84 = scmp.eq.s32.totalorder %s20, 2
      %p85 = por %p83, %p84
      %p86 = scmp.ne.s32.totalorder %s75, %s76
      %p87 = scmp.eq.s32.totalorder %s20, 0
      %p88 = por %p86, %p87
      %p89 = scmp.ne.s32.totalorder %s75, %s76
      %p90 = scmp.eq.s32.totalorder %s21, 2
      %p91 = por %p89, %p90
      %p93 = scmp.ne.s32.totalorder %s76, %s92
      %p94 = scmp.eq.s32.totalorder %s21, 0
      %p95 = por %p93, %p94
      %p96 = scmp.le.s32.totalorder 1, %s15
      %p97 = scmp.lt.s32.totalorder %s15, 4
      %p98 = pnand %p96, %p97
      %p99 = pneg %p98
      // Predicated region
      $region9: #{tpu_custom_call.1} parent=5 // pred_check
        _
      $region10: #{tpu_custom_call.1} parent=5 // pred_check_branch
        %101 = sbr.rel (%p98) target = $region12
      $region11: #{tpu_custom_call.1} parent=5 // pred_region
        %s102 = ssub.s32 %s15, 1
        // Predicated region
        $region13: #{tpu_custom_call.1} parent=11 // pred_check
          %p103 = pneg %p62
        $region14: #{tpu_custom_call.1} parent=11 // pred_check_branch
          %105 = sbr.rel (%p103) target = $region16
        $region15: #{tpu_custom_call.1} parent=11 // pred_region
          %s107 = ssub.s32 384, 384
          %108 = vsyncadd [#allocation6], %s107
          %s110 = sshll.u32 [#allocation5], 4
          %s111 = int_to_ptr.vmem [resolvable:$true] %s110
          %113 = dma.hbm_to_vmem [thread:$0]  %s1, 384, %s111, [#allocation6]
        $region16: #{tpu_custom_call.1} parent=11 // pred_fallthru
          _
      $region12: #{tpu_custom_call.1} parent=5 // pred_fallthru
        _
      %p114 = scmp.lt.s32.totalorder %s15, 3
      // Predicated region
      $region17: #{tpu_custom_call.1} parent=5 // pred_check
        %p115 = pneg %p114
      $region18: #{tpu_custom_call.1} parent=5 // pred_check_branch
        %117 = sbr.rel (%p115) target = $region20
      $region19: #{tpu_custom_call.1} parent=5 // pred_region
        // Predicated region
        $region21: #{tpu_custom_call.1} parent=19 // pred_check
          %p118 = pneg %p35
        $region22: #{tpu_custom_call.1} parent=19 // pred_check_branch
          %120 = sbr.rel (%p118) target = $region24
        $region23: #{tpu_custom_call.1} parent=19 // pred_region
          %s121 = sand.u32 %s25, 1
          %s122 = scalar_lea.sflag [#allocation3], %s121
          %s123 = sand.u32 %s25, 1
          %s124 = scalar_lea.vmem [#allocation2], %s123
          %s126 = ssub.s32 16, 16
          %127 = vsyncadd %s122, %s126
          %s128 = smul.addr %s15, 16
          %s129 = scalar_lea.hbm %s0, %s128
          %s131 = sshll.u32 %s124, 4
          %s132 = int_to_ptr.vmem [resolvable:$true] %s131
          %134 = dma.hbm_to_vmem [thread:$0]  %s129, 16, %s132, %s122
        $region24: #{tpu_custom_call.1} parent=19 // pred_fallthru
          _
      $region20: #{tpu_custom_call.1} parent=5 // pred_fallthru
        _
      %p135 = scmp.le.s32.totalorder 1, %s15
      %p136 = scmp.lt.s32.totalorder %s15, 4
      %p137 = pnand %p135, %p136
      %p138 = pneg %p137
      // Predicated region
      $region25: #{tpu_custom_call.1} parent=5 // pred_check
        _
      $region26: #{tpu_custom_call.1} parent=5 // pred_check_branch
        %140 = sbr.rel (%p137) target = $region28
      $region27: #{tpu_custom_call.1} parent=5 // pred_region
        %s141 = ssub.s32 %s15, 1
        %s142 = sand.u32 %s28, 1
        %s143 = scalar_lea.sflag [#allocation3], %s142
        %s144 = sand.u32 %s28, 1
        %s145 = scalar_lea.vmem [#allocation2], %s144
        // Predicated region
        $region29: #{tpu_custom_call.1} parent=27 // pred_check
          %p146 = pneg %p41
        $region30: #{tpu_custom_call.1} parent=27 // pred_check_branch
          %148 = sbr.rel (%p146) target = $region32
        $region31: #{tpu_custom_call.1} parent=27 // pred_region
          %149 = dma.done %s143, 16
        $region32: #{tpu_custom_call.1} parent=27 // pred_fallthru
          _
        // Predicated region
        $region33: #{tpu_custom_call.1} parent=27 // pred_check
          %p150 = pneg %p62
        $region34: #{tpu_custom_call.1} parent=27 // pred_check_branch
          %152 = sbr.rel (%p150) target = $region36
        $region35: #{tpu_custom_call.1} parent=27 // pred_region
          %153 = dma.done [#allocation6], 384
        $region36: #{tpu_custom_call.1} parent=27 // pred_fallthru
          _
        %s154 = sand.u32 %s28, 1
        %s155 = scalar_lea.sflag [#allocation3], %s154
        %s156 = sand.u32 %s28, 1
        %s157 = scalar_lea.vmem [#allocation2], %s156
        %p158 = pneg %p41
        %p159 = pneg %p38
        %p160 = pneg %p62
        %p161 = pneg %p59
        %p162 = pneg %p88
        %p163 = pneg %p85
        %s164 = sand.u32 %s75, 1
        %s165 = scalar_lea.sflag [#allocation4], %s164
        %s166 = sand.u32 %s75, 1
        %s167 = smul.addr %s166, 8
        %s168 = scalar_lea.vmem [#allocation7], %s167
        %v169 = vld [vmem:[%s145] sm:$0x1]
        %v170 = vlaneseq
        %v171 = vshrl.u32 %v170, 7
        %v172 = vadd.s32 %v171, 8
        %v173 = vadd.s32 %v171, 16
        %v174 = vadd.s32 %v171, 24
        %v175 = vadd.s32 %v171, 32
        %v176 = vadd.s32 %v171, 40
        %v177 = vadd.s32 %v171, 48
        %v178 = vadd.s32 %v171, 56
        %v179 = vadd.s32 %v171, 64
        %v180 = vadd.s32 %v171, 72
        %v181 = vadd.s32 %v171, 80
        %v182 = vadd.s32 %v171, 88
        %v183 = vadd.s32 %v171, 96
        %v184 = vadd.s32 %v171, 104
        %v185 = vadd.s32 %v171, 112
        %v186 = vadd.s32 %v171, 120
        %v187 = vadd.s32 %v171, 128
        %v188 = vadd.s32 %v171, 136
        %v189 = vadd.s32 %v171, 144
        %v190 = vadd.s32 %v171, 152
        %v191 = vadd.s32 %v171, 160
        %v192 = vadd.s32 %v171, 168
        %v193 = vadd.s32 %v171, 176
        %v194 = vadd.s32 %v171, 184
        %v195 = vadd.s32 %v171, 192
        %v196 = vadd.s32 %v171, 200
        %v197 = vadd.s32 %v171, 208
        %v198 = vadd.s32 %v171, 216
        %v199 = vadd.s32 %v171, 224
        %v200 = vadd.s32 %v171, 232
        %v201 = vadd.s32 %v171, 240
        %v202 = vadd.s32 %v171, 248
        %v203 = vadd.s32 %v171, 256
        %v204 = vadd.s32 %v171, 264
        %v205 = vadd.s32 %v171, 272
        %v206 = vadd.s32 %v171, 280
        %v207 = vadd.s32 %v171, 288
        %v208 = vadd.s32 %v171, 296
        %v209 = vadd.s32 %v171, 304
        %v210 = vadd.s32 %v171, 312
        %v211 = vadd.s32 %v171, 320
        %v212 = vadd.s32 %v171, 328
        %v213 = vadd.s32 %v171, 336
        %v214 = vadd.s32 %v171, 344
        %v215 = vadd.s32 %v171, 352
        %v216 = vadd.s32 %v171, 360
        %v217 = vadd.s32 %v171, 368
        %v218 = vadd.s32 %v171, 376
        %v219 = vlaneseq
        %v220 = vshrl.u32 %v219, 7
        %v221 = vsub.s32 0, %v220
        %v222 = vrot.slane %v169, %v221
        %vm223 = vcmp.eq.s32.totalorder %v171, %v222
        %vm224 = vcmp.eq.s32.totalorder %v172, %v222
        %vm225 = vcmp.eq.s32.totalorder %v173, %v222
        %vm226 = vcmp.eq.s32.totalorder %v174, %v222
        %vm227 = vcmp.eq.s32.totalorder %v175, %v222
        %vm228 = vcmp.eq.s32.totalorder %v176, %v222
        %vm229 = vcmp.eq.s32.totalorder %v177, %v222
        %vm230 = vcmp.eq.s32.totalorder %v178, %v222
        %vm231 = vcmp.eq.s32.totalorder %v179, %v222
        %vm232 = vcmp.eq.s32.totalorder %v180, %v222
        %vm233 = vcmp.eq.s32.totalorder %v181, %v222
        %vm234 = vcmp.eq.s32.totalorder %v182, %v222
        %vm235 = vcmp.eq.s32.totalorder %v183, %v222
        %vm236 = vcmp.eq.s32.totalorder %v184, %v222
        %vm237 = vcmp.eq.s32.totalorder %v185, %v222
        %vm238 = vcmp.eq.s32.totalorder %v186, %v222
        %vm239 = vcmp.eq.s32.totalorder %v187, %v222
        %vm240 = vcmp.eq.s32.totalorder %v188, %v222
        %vm241 = vcmp.eq.s32.totalorder %v189, %v222
        %vm242 = vcmp.eq.s32.totalorder %v190, %v222
        %vm243 = vcmp.eq.s32.totalorder %v191, %v222
        %vm244 = vcmp.eq.s32.totalorder %v192, %v222
        %vm245 = vcmp.eq.s32.totalorder %v193, %v222
        %vm246 = vcmp.eq.s32.totalorder %v194, %v222
        %vm247 = vcmp.eq.s32.totalorder %v195, %v222
        %vm248 = vcmp.eq.s32.totalorder %v196, %v222
        %vm249 = vcmp.eq.s32.totalorder %v197, %v222
        %vm250 = vcmp.eq.s32.totalorder %v198, %v222
        %vm251 = vcmp.eq.s32.totalorder %v199, %v222
        %vm252 = vcmp.eq.s32.totalorder %v200, %v222
        %vm253 = vcmp.eq.s32.totalorder %v201, %v222
        %vm254 = vcmp.eq.s32.totalorder %v202, %v222
        %vm255 = vcmp.eq.s32.totalorder %v203, %v222
        %vm256 = vcmp.eq.s32.totalorder %v204, %v222
        %vm257 = vcmp.eq.s32.totalorder %v205, %v222
        %vm258 = vcmp.eq.s32.totalorder %v206, %v222
        %vm259 = vcmp.eq.s32.totalorder %v207, %v222
        %vm260 = vcmp.eq.s32.totalorder %v208, %v222
        %vm261 = vcmp.eq.s32.totalorder %v209, %v222
        %vm262 = vcmp.eq.s32.totalorder %v210, %v222
        %vm263 = vcmp.eq.s32.totalorder %v211, %v222
        %vm264 = vcmp.eq.s32.totalorder %v212, %v222
        %vm265 = vcmp.eq.s32.totalorder %v213, %v222
        %vm266 = vcmp.eq.s32.totalorder %v214, %v222
        %vm267 = vcmp.eq.s32.totalorder %v215, %v222
        %vm268 = vcmp.eq.s32.totalorder %v216, %v222
        %vm269 = vcmp.eq.s32.totalorder %v217, %v222
        %vm270 = vcmp.eq.s32.totalorder %v218, %v222
        %v271 = vsel %vm223, 1, 0
        %v272 = vsel %vm224, 1, 0
        %v273 = vsel %vm225, 1, 0
        %v274 = vsel %vm226, 1, 0
        %v275 = vsel %vm227, 1, 0
        %v276 = vsel %vm228, 1, 0
        %v277 = vsel %vm229, 1, 0
        %v278 = vsel %vm230, 1, 0
        %v279 = vsel %vm231, 1, 0
        %v280 = vsel %vm232, 1, 0
        %v281 = vsel %vm233, 1, 0
        %v282 = vsel %vm234, 1, 0
        %v283 = vsel %vm235, 1, 0
        %v284 = vsel %vm236, 1, 0
        %v285 = vsel %vm237, 1, 0
        %v286 = vsel %vm238, 1, 0
        %v287 = vsel %vm239, 1, 0
        %v288 = vsel %vm240, 1, 0
        %v289 = vsel %vm241, 1, 0
        %v290 = vsel %vm242, 1, 0
        %v291 = vsel %vm243, 1, 0
        %v292 = vsel %vm244, 1, 0
        %v293 = vsel %vm245, 1, 0
        %v294 = vsel %vm246, 1, 0
        %v295 = vsel %vm247, 1, 0
        %v296 = vsel %vm248, 1, 0
        %v297 = vsel %vm249, 1, 0
        %v298 = vsel %vm250, 1, 0
        %v299 = vsel %vm251, 1, 0
        %v300 = vsel %vm252, 1, 0
        %v301 = vsel %vm253, 1, 0
        %v302 = vsel %vm254, 1, 0
        %v303 = vsel %vm255, 1, 0
        %v304 = vsel %vm256, 1, 0
        %v305 = vsel %vm257, 1, 0
        %v306 = vsel %vm258, 1, 0
        %v307 = vsel %vm259, 1, 0
        %v308 = vsel %vm260, 1, 0
        %v309 = vsel %vm261, 1, 0
        %v310 = vsel %vm262, 1, 0
        %v311 = vsel %vm263, 1, 0
        %v312 = vsel %vm264, 1, 0
        %v313 = vsel %vm265, 1, 0
        %v314 = vsel %vm266, 1, 0
        %v315 = vsel %vm267, 1, 0
        %v316 = vsel %vm268, 1, 0
        %v317 = vsel %vm269, 1, 0
        %v318 = vsel %vm270, 1, 0
        %v319 = vcvt.s32.f32 %v271
        %v320 = vcvt.s32.f32 %v272
        %v321 = vcvt.s32.f32 %v273
        %v322 = vcvt.s32.f32 %v274
        %v323 = vcvt.s32.f32 %v275
        %v324 = vcvt.s32.f32 %v276
        %v325 = vcvt.s32.f32 %v277
        %v326 = vcvt.s32.f32 %v278
        %v327 = vcvt.s32.f32 %v279
        %v328 = vcvt.s32.f32 %v280
        %v329 = vcvt.s32.f32 %v281
        %v330 = vcvt.s32.f32 %v282
        %v331 = vcvt.s32.f32 %v283
        %v332 = vcvt.s32.f32 %v284
        %v333 = vcvt.s32.f32 %v285
        %v334 = vcvt.s32.f32 %v286
        %v335 = vcvt.s32.f32 %v287
        %v336 = vcvt.s32.f32 %v288
        %v337 = vcvt.s32.f32 %v289
        %v338 = vcvt.s32.f32 %v290
        %v339 = vcvt.s32.f32 %v291
        %v340 = vcvt.s32.f32 %v292
        %v341 = vcvt.s32.f32 %v293
        %v342 = vcvt.s32.f32 %v294
        %v343 = vcvt.s32.f32 %v295
        %v344 = vcvt.s32.f32 %v296
        %v345 = vcvt.s32.f32 %v297
        %v346 = vcvt.s32.f32 %v298
        %v347 = vcvt.s32.f32 %v299
        %v348 = vcvt.s32.f32 %v300
        %v349 = vcvt.s32.f32 %v301
        %v350 = vcvt.s32.f32 %v302
        %v351 = vcvt.s32.f32 %v303
        %v352 = vcvt.s32.f32 %v304
        %v353 = vcvt.s32.f32 %v305
        %v354 = vcvt.s32.f32 %v306
        %v355 = vcvt.s32.f32 %v307
        %v356 = vcvt.s32.f32 %v308
        %v357 = vcvt.s32.f32 %v309
        %v358 = vcvt.s32.f32 %v310
        %v359 = vcvt.s32.f32 %v311
        %v360 = vcvt.s32.f32 %v312
        %v361 = vcvt.s32.f32 %v313
        %v362 = vcvt.s32.f32 %v314
        %v363 = vcvt.s32.f32 %v315
        %v364 = vcvt.s32.f32 %v316
        %v365 = vcvt.s32.f32 %v317
        %v366 = vcvt.s32.f32 %v318
        %v367 = vld [vmem:[#allocation5] sm:$0xff]
        %v368 = vld [vmem:[#allocation5 + $0x8] sm:$0xff]
        %v369 = vld [vmem:[#allocation5 + $0x10] sm:$0xff]
        %370 = vmatprep.subr.mxu0 0.0
        %371 = vmatpush1.msra.mxu0 %v319
        %372 = vmatprep.subr.mxu0 0.0
        %373 = vmatpush1.msra.mxu0 %v320
        %374 = vmatprep.subr.mxu0 0.0
        %375 = vmatpush1.msra.mxu0 %v321
        %376 = vmatprep.subr.mxu0 0.0
        %377 = vmatpush1.msra.mxu0 %v322
        %378 = vmatprep.subr.mxu0 0.0
        %379 = vmatpush1.msra.mxu0 %v323
        %380 = vmatprep.subr.mxu0 0.0
        %381 = vmatpush1.msra.mxu0 %v324
        %382 = vmatprep.subr.mxu0 0.0
        %383 = vmatpush1.msra.mxu0 %v325
        %384 = vmatprep.subr.mxu0 0.0
        %385 = vmatpush1.msra.mxu0 %v326
        %386 = vmatprep.subr.mxu0 0.0
        %387 = vmatpush1.msra.mxu0 %v327
        %388 = vmatprep.subr.mxu0 0.0
        %389 = vmatpush1.msra.mxu0 %v328
        %390 = vmatprep.subr.mxu0 0.0
        %391 = vmatpush1.msra.mxu0 %v329
        %392 = vmatprep.subr.mxu0 0.0
        %393 = vmatpush1.msra.mxu0 %v330
        %394 = vmatprep.subr.mxu0 0.0
        %395 = vmatpush1.msra.mxu0 %v331
        %396 = vmatprep.subr.mxu0 0.0
        %397 = vmatpush1.msra.mxu0 %v332
        %398 = vmatprep.subr.mxu0 0.0
        %399 = vmatpush1.msra.mxu0 %v333
        %400 = vmatprep.subr.mxu0 0.0
        %401 = vmatpush1.msra.mxu0 %v334
        %402 = vmatprep.subr.mxu0 0.0
        %403 = vmatpush1.msra.mxu0 %v335
        %404 = vmatprep.subr.mxu0 0.0
        %405 = vmatpush1.msra.mxu0 %v336
        %406 = vmatprep.subr.mxu0 0.0
        %407 = vmatpush1.msra.mxu0 %v337
        %408 = vmatprep.subr.mxu0 0.0
        %409 = vmatpush1.msra.mxu0 %v338
        %410 = vmatprep.subr.mxu0 0.0
        %411 = vmatpush1.msra.mxu0 %v339
        %412 = vmatprep.subr.mxu0 0.0
        %413 = vmatpush1.msra.mxu0 %v340
        %414 = vmatprep.subr.mxu0 0.0
        %415 = vmatpush1.msra.mxu0 %v341
        %416 = vmatprep.subr.mxu0 0.0
        %417 = vmatpush1.msra.mxu0 %v342
        %418 = vmatprep.subr.mxu0 0.0
        %419 = vmatpush1.msra.mxu0 %v343
        %420 = vmatprep.subr.mxu0 0.0
        %421 = vmatpush1.msra.mxu0 %v344
        %422 = vmatprep.subr.mxu0 0.0
        %423 = vmatpush1.msra.mxu0 %v345
        %424 = vmatprep.subr.mxu0 0.0
        %425 = vmatpush1.msra.mxu0 %v346
        %426 = vmatprep.subr.mxu0 0.0
        %427 = vmatpush1.msra.mxu0 %v347
        %428 = vmatprep.subr.mxu0 0.0
        %429 = vmatpush1.msra.mxu0 %v348
        %430 = vmatprep.subr.mxu0 0.0
        %431 = vmatpush1.msra.mxu0 %v349
        %432 = vmatprep.subr.mxu0 0.0
        %433 = vmatpush1.msra.mxu0 %v350
        %434 = vmatprep.mubr.f32.mxu0 %v368
        %435 = vmatmul.mubr.f32.gmra.mrb[0].mxu0 %v367
        %v436 = vpop.f32.mrb[0].mxu0
        %v437 = vadd.f32 0.0, %v436
        %v438 = vpop.f32.mrb[0].mxu0
        %439 = vdwg.mxu0
        %440 = vmatprep.subr.mxu0 0.0
        %441 = vmatpush1.msra.mxu0 %v351
        %442 = vmatprep.subr.mxu0 0.0
        %443 = vmatpush1.msra.mxu0 %v352
        %444 = vmatprep.subr.mxu0 0.0
        %445 = vmatpush1.msra.mxu0 %v353
        %446 = vmatprep.subr.mxu0 0.0
        %447 = vmatpush1.msra.mxu0 %v354
        %448 = vmatprep.subr.mxu0 0.0
        %449 = vmatpush1.msra.mxu0 %v355
        %450 = vmatprep.subr.mxu0 0.0
        %451 = vmatpush1.msra.mxu0 %v356
        %452 = vmatprep.subr.mxu0 0.0
        %453 = vmatpush1.msra.mxu0 %v357
        %454 = vmatprep.subr.mxu0 0.0
        %455 = vmatpush1.msra.mxu0 %v358
        %456 = vmatprep.subr.mxu0 0.0
        %457 = vmatpush1.msra.mxu0 %v359
        %458 = vmatprep.subr.mxu0 0.0
        %459 = vmatpush1.msra.mxu0 %v360
        %460 = vmatprep.subr.mxu0 0.0
        %461 = vmatpush1.msra.mxu0 %v361
        %462 = vmatprep.subr.mxu0 0.0
        %463 = vmatpush1.msra.mxu0 %v362
        %464 = vmatprep.subr.mxu0 0.0
        %465 = vmatpush1.msra.mxu0 %v363
        %466 = vmatprep.subr.mxu0 0.0
        %467 = vmatpush1.msra.mxu0 %v364
        %468 = vmatprep.subr.mxu0 0.0
        %469 = vmatpush1.msra.mxu0 %v365
        %470 = vmatprep.subr.mxu0 0.0
        %471 = vmatpush1.msra.mxu0 %v366
        %472 = vmatprep.subr.mxu0 0.0
        %473 = vmatpush1.msra.mxu0 0.0
        %474 = vmatprep.subr.mxu0 0.0
        %475 = vmatpush1.msra.mxu0 0.0
        %476 = vmatprep.subr.mxu0 0.0
        %477 = vmatpush1.msra.mxu0 0.0
        %478 = vmatprep.subr.mxu0 0.0
        %479 = vmatpush1.msra.mxu0 0.0
        %480 = vmatprep.subr.mxu0 0.0
        %481 = vmatpush1.msra.mxu0 0.0
        %482 = vmatprep.subr.mxu0 0.0
        %483 = vmatpush1.msra.mxu0 0.0
        %484 = vmatprep.subr.mxu0 0.0
        %485 = vmatpush1.msra.mxu0 0.0
        %486 = vmatprep.subr.mxu0 0.0
        %487 = vmatpush1.msra.mxu0 0.0
        %488 = vmatprep.subr.mxu0 0.0
        %489 = vmatpush1.msra.mxu0 0.0
        %490 = vmatprep.subr.mxu0 0.0
        %491 = vmatpush1.msra.mxu0 0.0
        %492 = vmatprep.subr.mxu0 0.0
        %493 = vmatpush1.msra.mxu0 0.0
        %494 = vmatprep.subr.mxu0 0.0
        %495 = vmatpush1.msra.mxu0 0.0
        %496 = vmatprep.subr.mxu0 0.0
        %497 = vmatpush1.msra.mxu0 0.0
        %498 = vmatprep.subr.mxu0 0.0
        %499 = vmatpush1.msra.mxu0 0.0
        %500 = vmatprep.subr.mxu0 0.0
        %501 = vmatpush1.msra.mxu0 0.0
        %502 = vmatprep.subr.mxu0 0.0
        %503 = vmatpush1.msra.mxu0 0.0
        %504 = vmatprep.mubr.f32.mxu0 0.0
        %505 = vmatmul.mubr.f32.gmra.mrb[0].mxu0 %v369
        %v506 = vpop.f32.mrb[0].mxu0
        %v507 = vadd.f32 %v437, %v506
        %v508 = vpop.f32.mrb[0].mxu0
        %509 = vdwg.mxu0
        %510 = vst [vmem:[%s168] sm:$0xff] %v507
        %s511 = sand.u32 %s75, 1
        %s512 = scalar_lea.sflag [#allocation4], %s511
        %s513 = sand.u32 %s75, 1
        %s514 = smul.addr %s513, 8
        %s515 = scalar_lea.vmem [#allocation7], %s514
        // Predicated region
        $region37: #{tpu_custom_call.1} parent=27 // pred_check
          %p516 = pneg %p85
        $region38: #{tpu_custom_call.1} parent=27 // pred_check_branch
          %518 = sbr.rel (%p516) target = $region40
        $region39: #{tpu_custom_call.1} parent=27 // pred_region
          %s520 = ssub.s32 128, 128
          %521 = vsyncadd %s512, %s520
          %s522 = smul.addr %s20, 128
          %s523 = scalar_lea.hbm %s2, %s522
          %s525 = sshll.u32 %s515, 4
          %s526 = int_to_ptr.vmem [resolvable:$true] %s525
          %528 = dma.vmem_to_hbm [thread:$0]  %s526, 128, %s523, %s512
        $region40: #{tpu_custom_call.1} parent=27 // pred_fallthru
          _
      $region28: #{tpu_custom_call.1} parent=5 // pred_fallthru
        _
      %p529 = scmp.le.s32.totalorder 2, %s15
      // Predicated region
      $region41: #{tpu_custom_call.1} parent=5 // pred_check
        %p530 = pneg %p529
      $region42: #{tpu_custom_call.1} parent=5 // pred_check_branch
        %532 = sbr.rel (%p530) target = $region44
      $region43: #{tpu_custom_call.1} parent=5 // pred_region
        %s533 = ssub.s32 %s15, 2
        // Predicated region
        $region45: #{tpu_custom_call.1} parent=43 // pred_check
          %p534 = pneg %p91
        $region46: #{tpu_custom_call.1} parent=43 // pred_check_branch
          %536 = sbr.rel (%p534) target = $region48
        $region47: #{tpu_custom_call.1} parent=43 // pred_region
          %s537 = sand.u32 %s76, 1
          %s538 = scalar_lea.sflag [#allocation4], %s537
          %s539 = sand.u32 %s76, 1
          %s540 = smul.addr %s539, 8
          %s541 = scalar_lea.vmem [#allocation7], %s540
          %542 = dma.done %s538, 128
        $region48: #{tpu_custom_call.1} parent=43 // pred_fallthru
          _
      $region44: #{tpu_custom_call.1} parent=5 // pred_fallthru
        _
    $region6: #{tpu_custom_call.1} parent=1 // loop_footer
      %s19 = sadd.s32 1, %s15
    $region7: #{tpu_custom_call.1} parent=1 // loop_footer_branch
      %14 = sbr.rel target = $region3
    $region8: #{tpu_custom_call.1} parent=1 // loop_exit
      _
    %543 = vsyncpa [#allocation3], 1
    %s544 = scalar_lea.sflag [#allocation3], 1
    %545 = vsyncpa %s544, 1
    %546 = vsyncpa [#allocation6], 1
    %547 = vsyncpa [#allocation4], 1
    %s548 = scalar_lea.sflag [#allocation4], 1
    %549 = vsyncpa %s548, 1

</llo_original>
